<compile_context>
chip_gen: v6e
topology: v6e:2x2x1
jax: 0.10.0
libtpu: 0.0.40
codegen_flags: <defaults>
</compile_context>

<pallas_src>
import functools

import jax
import jax.numpy as jnp
from jax.experimental import pallas as pl
from jax.experimental.pallas import tpu as pltpu


def _patch_embed_kernel(x_ref, w_ref, b_ref, o_ref):
    # x_ref: (TM, K) patch rows for this grid step (streamed, double-buffered)
    # w_ref: (K, E)  projection weight (constant index_map -> VMEM resident)
    # b_ref: (1, E)  bias, f32
    # o_ref: (TM, E) output tile
    acc = jnp.dot(x_ref[...], w_ref[...], preferred_element_type=jnp.float32)
    # NOTE: for production embed_dim (default 768 >= 128) this store is
    # lane-dense.  TODO(synk): if E stays < 128, pack (TM, E) -> (TM*E/128, 128)
    # for unmasked stores.
    o_ref[...] = (acc + b_ref[...]).astype(o_ref.dtype)


def _round_up(x, m):
    return (x + m - 1) // m * m


def token_learner_forward(x, weight, bias, patch_size, *,
                          compute_dtype=jnp.bfloat16, tm_max=1024):
    """x: (B, C, H, W); weight: (E, C, P, P); bias: (E,).

    Returns (B, num_patches, E), matching PyTorch TokenLearner.forward.
    """
    B, C, H, W = x.shape
    E = weight.shape[0]
    P = patch_size
    Hp, Wp = H // P, W // P
    N = Hp * Wp
    K = C * P * P
    M = B * N
    out_dtype = x.dtype
    cdt = compute_dtype

    # --- patch extraction (relayout only, no compute) -----------------------
    # (B, C, Hp, P, Wp, P) -> (B, Hp, Wp, C, P, P) -> (B*N, C*P*P), cast fused
    # into the relayout so the HBM round trip is half-width in bf16.
    # TODO(synk): store activations patch-major upstream to drop this relayout.
    xp = x.reshape(B, C, Hp, P, Wp, P)
    xp = jnp.transpose(xp, (0, 2, 4, 1, 3, 5)).reshape(M, K).astype(cdt)

    # Conv weight (E, C, P, P) -> (C*P*P, E); bias kept f32 (added post-acc).
    w_mat = weight.reshape(E, K).T.astype(cdt)
    b_row = bias.reshape(1, E).astype(jnp.float32)

    # --- TM selection: biggest tile that fits a portable VMEM budget --------
    # budget ~ 2*TM*K (x double-buffer) + 2*TM*E (out double-buffer)
    #          + K*E (resident weight) + bias
    bytes_in = jnp.dtype(cdt).itemsize
    bytes_out = jnp.dtype(out_dtype).itemsize
    vmem_tile_budget = 40 * 1024 * 1024           # headroom under v7x 64 MiB
    fixed = K * E * bytes_in + E * 4
    per_row = 2 * K * bytes_in + 2 * E * bytes_out
    row_align = 16 if bytes_in < 4 else 8
    tm_fit = max(row_align, (vmem_tile_budget - fixed) // max(per_row, 1))
    tm = int(min(tm_max, tm_fit, _round_up(M, row_align)))
    tm = max(row_align, (tm // row_align) * row_align)

    # Pad M up to a multiple of TM (keep the big tile; don't shrink to a
    # divisor of M).  Padded rows are sliced off after the call.
    m_pad = _round_up(M, tm)
    if m_pad != M:
        xp = jnp.pad(xp, ((0, m_pad - M), (0, 0)))

    out = pl.pallas_call(
        _patch_embed_kernel,
        out_shape=jax.ShapeDtypeStruct((m_pad, E), out_dtype),
        grid=(m_pad // tm,),
        in_specs=[
            pl.BlockSpec((tm, K), lambda i: (i, 0)),   # streamed activations
            pl.BlockSpec((K, E), lambda i: (0, 0)),    # resident weight
            pl.BlockSpec((1, E), lambda i: (0, 0)),    # resident bias
        ],
        out_specs=pl.BlockSpec((tm, E), lambda i: (i, 0)),
        compiler_params=pltpu.CompilerParams(
            # Independent M tiles -> shard across TensorCores (2 TCs on v7x).
            dimension_semantics=("parallel",),
            vmem_limit_bytes=50 * 1024 * 1024,
            # Let XLA fuse the relayout/cast producers into the input DMA.
            allow_input_fusion=[True, True, True],
        ),
    )(xp, w_mat, b_row)

    out = out[:M]
    return out.reshape(B, N, E)


if __name__ == "__main__":
    # Small shapes consistent with the module: img_size=16, patch_size=4,
    # in_chans=4, embed_dim=32  ->  num_patches = (16//4)**2 = 16
    B, C, H, W = 2, 4, 16, 16
    P = 4
    E = 32

    key = jax.random.PRNGKey(0)
    kx, kw, kb = jax.random.split(key, 3)

    x = jax.random.normal(kx, (B, C, H, W), dtype=jnp.float32)
    # Deterministic synthetic Conv2d parameters (shapes of nn.Conv2d(C, E, P, P)).
    weight = jax.random.normal(kw, (E, C, P, P), dtype=jnp.float32) * 0.02
    bias = jax.random.normal(kb, (E,), dtype=jnp.float32) * 0.02

    # Plain-JAX reference (same math as torch Conv2d with stride == kernel_size).
    ref = jax.lax.conv_general_dilated(
        x, weight, window_strides=(P, P), padding="VALID",
        dimension_numbers=("NCHW", "OIHW", "NCHW"),
    ) + bias[None, :, None, None]
    ref = ref.reshape(B, E, -1).transpose(0, 2, 1)

    # Main path: bf16 activations/weights, f32 accumulation.
    fwd_bf16 = jax.jit(functools.partial(token_learner_forward, patch_size=P))
    out = jax.block_until_ready(fwd_bf16(x, weight, bias))
    assert out.shape == (B, (H // P) * (W // P), E)
    assert jnp.allclose(out, ref, atol=2e-2, rtol=2e-2)

    # Full-f32 path, tight tolerance (validates kernel structure bit-for-bit-ish).
    fwd_f32 = jax.jit(functools.partial(
        token_learner_forward, patch_size=P, compute_dtype=jnp.float32))
    out32 = jax.block_until_ready(fwd_f32(x, weight, bias))
    assert jnp.allclose(out32, ref, atol=1e-4, rtol=1e-4)

    print("KERNEL_OK")
</pallas_src>

<mosaic_0001>
module attributes {stable_mosaic.version = 11 : i64} {
  func.func @_patch_embed_kernel(%arg0: i32, %arg1: memref<32x64xbf16, #tpu.memory_space<vmem>>, %arg2: memref<64x32xbf16, #tpu.memory_space<vmem>>, %arg3: memref<1x32xf32, #tpu.memory_space<vmem>>, %arg4: memref<32x32xf32, #tpu.memory_space<vmem>>) attributes {dimension_semantics = [#tpu.dimension_semantics<parallel>], iteration_bounds = array<i64: 1>, scalar_prefetch = 0 : i64, scratch_operands = 0 : i64, tpu.core_type = #tpu.core_type<tc>, window_params = [{transform_indices = @transform_0, window_bounds = array<i64: 32, 64>}, {pipeline_mode = #tpu.pipeline_mode<synchronous>, transform_indices = @transform_1, window_bounds = array<i64: 64, 32>}, {pipeline_mode = #tpu.pipeline_mode<synchronous>, transform_indices = @transform_2, window_bounds = array<i64: 1, 32>}, {transform_indices = @transform_3, window_bounds = array<i64: 32, 32>}]} {
    %c0 = arith.constant 0 : index
    %c0_0 = arith.constant 0 : index
    %0 = vector.load %arg1[%c0, %c0_0] : memref<32x64xbf16, #tpu.memory_space<vmem>>, vector<32x64xbf16>
    %c0_1 = arith.constant 0 : index
    %c0_2 = arith.constant 0 : index
    %1 = vector.load %arg2[%c0_1, %c0_2] : memref<64x32xbf16, #tpu.memory_space<vmem>>, vector<64x32xbf16>
    %cst = arith.constant dense<0.000000e+00> : vector<32x32xf32>
    %2 = tpu.matmul %0, %1, %cst {dimension_numbers = #tpu.dot_dimension_numbers<[1], [0], [0], [1], [0, 0, 1, 1], [], []>} : vector<32x64xbf16>, vector<64x32xbf16>, vector<32x32xf32> -> vector<32x32xf32>
    %c0_3 = arith.constant 0 : index
    %c0_4 = arith.constant 0 : index
    %3 = vector.load %arg3[%c0_3, %c0_4] : memref<1x32xf32, #tpu.memory_space<vmem>>, vector<1x32xf32>
    %4 = vector.broadcast %3 : vector<1x32xf32> to vector<32x32xf32>
    %5 = arith.addf %2, %4 : vector<32x32xf32>
    %c0_5 = arith.constant 0 : index
    %c0_6 = arith.constant 0 : index
    %6 = vector.load %arg4[%c0_5, %c0_6] : memref<32x32xf32, #tpu.memory_space<vmem>>, vector<32x32xf32>
    tpu.vector_store %arg4[%c0_5, %c0_6], %5 {strides = array<i32>} : memref<32x32xf32, #tpu.memory_space<vmem>>, vector<32x32xf32>,
    return
  }
  func.func @transform_0(%arg0: i32) -> (i32, i32) {
    %c0_i32 = arith.constant 0 : i32
    %c0_i32_0 = arith.constant 0 : i32
    return %arg0, %c0_i32 : i32, i32
  }
  func.func @transform_1(%arg0: i32) -> (i32, i32) {
    %c0_i32 = arith.constant 0 : i32
    %c0_i32_0 = arith.constant 0 : i32
    %c0_i32_1 = arith.constant 0 : i32
    return %c0_i32, %c0_i32_0 : i32, i32
  }
  func.func @transform_2(%arg0: i32) -> (i32, i32) {
    %c0_i32 = arith.constant 0 : i32
    %c0_i32_0 = arith.constant 0 : i32
    %c0_i32_1 = arith.constant 0 : i32
    return %c0_i32, %c0_i32_0 : i32, i32
  }
  func.func @transform_3(%arg0: i32) -> (i32, i32) {
    %c0_i32 = arith.constant 0 : i32
    %c0_i32_0 = arith.constant 0 : i32
    return %arg0, %c0_i32 : i32, i32
  }
}

</mosaic_0001>

<llo_original>
// kernel: token_learner_forward.2
$region0: #{token_learner_forward.2}
  #allocation0 [shape = 'u32[]', space=smem, size = 0x4, offset = 0x4, fixed_abs, tag = 'smem constant byte address 0x4 - core index']
  #allocation1 [shape = 'u32[144,128]{1,0:T(1,128)}', space=vmem, size = 0x12000, scoped, tag = 'internal scratch']
  %s0 = inlined_call_operand.vmem [shape: bf16[32,64], index: 0, kind: input, shape index: {}]
  %s1 = inlined_call_operand.vmem [shape: bf16[64,32], index: 1, kind: input, shape index: {}]
  %s2 = inlined_call_operand.vmem [shape: f32[32], index: 2, kind: input, shape index: {}]
  %s3 = inlined_call_operand.hbm [shape: f32[32,32], index: 3, kind: output, shape index: {}]
  %s4 = sld [smem:[#allocation0]]
  $region22: #{token_learner_forward.2} parent=0
    _
  %s6 = ssub.s32 1, %s4
  %s7 = scalar_select 0, %s6, %s4
  $region1: #{token_learner_forward.2} parent=0
    #allocation2 [shape = 'u8[16384]{0}', space=vmem, size = 0x4000, scoped, tag = 'output window, operand 0, single buffered']
    #allocation3 [shape = 's32[1]{0}', space=sflag, size = 0x4, scoped, tag = 'scoped memory for token_learner_forward.2']
    #allocation4 [shape = 'u8[512]{0}', space=vmem, size = 0x400, dematerialized = true, scoped, tag = 'FusionAdapter Buffer %fusion.1 = f32[1,32]{1,0:T(1,128)} fusion(%param_2.1), kind=kLoop, calls=%fused_computation.2.clone, metadata={op_name="jit(token_learner_forward)/reshape" stack_frame_id=10}']
    %8 = vsyncpa [#allocation3], 0
    // Predicated region
    $region2: #{token_learner_forward.2} parent=1 // pred_check
      _
    $region3: #{token_learner_forward.2} parent=1 // pred_check_branch
      %10 = sbr.rel (0) target = $region5
    $region4: #{token_learner_forward.2} parent=1 // pred_region
      _
    $region5: #{token_learner_forward.2} parent=1 // pred_fallthru
      _
    // Predicated region
    $region6: #{token_learner_forward.2} parent=1 // pred_check
      _
    $region7: #{token_learner_forward.2} parent=1 // pred_check_branch
      %12 = sbr.rel (0) target = $region9
    $region8: #{token_learner_forward.2} parent=1 // pred_region
      _
    $region9: #{token_learner_forward.2} parent=1 // pred_fallthru
      _
    // Predicated region
    $region10: #{token_learner_forward.2} parent=1 // pred_check
      _
    $region11: #{token_learner_forward.2} parent=1 // pred_check_branch
      %14 = sbr.rel (0) target = $region13
    $region12: #{token_learner_forward.2} parent=1 // pred_region
      _
    $region13: #{token_learner_forward.2} parent=1 // pred_fallthru
      _
    %v15 = vld [vmem:[%s2] sm:$0x1]
    %s17 = ssub.s32 2, 1
    %18 = vst [vmem:[#allocation4] sm:%s17] %v15
    %v20 = vld [vmem:[%s0] sm:$0xf]
    %v21 = vld [vmem:[%s0 + $0x4] sm:$0xf]
    %v22 = vld [vmem:[%s0 + $0x8] sm:$0xf]
    %v23 = vld [vmem:[%s0 + $0xc] sm:$0xf]
    %v24 = vld [vmem:[%s1] sm:$0xf]
    %v25 = vld [vmem:[%s1 + $0x4] sm:$0xf]
    %v26 = vld [vmem:[%s1 + $0x8] sm:$0xf]
    %v27 = vld [vmem:[%s1 + $0xc] sm:$0xf]
    %v28 = vld [vmem:[%s1 + $0x10] sm:$0xf]
    %v29 = vld [vmem:[%s1 + $0x14] sm:$0xf]
    %v30 = vld [vmem:[%s1 + $0x18] sm:$0xf]
    %v31 = vld [vmem:[%s1 + $0x1c] sm:$0xf]
    %v32 = vld [vmem:[#allocation4] sm:$0x1]
    %v34 = vlaneseq
    %v35 = vshrl.u32 %v34, 7
    %v36 = vsub.s32 0, %v35
    %v37 = vrot.slane %v32, %v36
    %v43 = vunpack.c.l.b16 %v20
    %v44 = vunpack.c.l.b16 %v21
    %v45 = vunpack.c.l.b16 %v22
    %v46 = vunpack.c.l.b16 %v23
    %v47 = vpack.c.b16 %v44, %v43
    %v48 = vpack.c.b16 %v46, %v45
    %v57 = vunpack.c.l.b16 %v24
    %v58 = vunpack.c.l.b16 %v25
    %v59 = vunpack.c.l.b16 %v26
    %v60 = vunpack.c.l.b16 %v27
    %v61 = vunpack.c.l.b16 %v28
    %v62 = vunpack.c.l.b16 %v29
    %v63 = vunpack.c.l.b16 %v30
    %v64 = vunpack.c.l.b16 %v31
    %v65 = vpack.c.b16 %v58, %v57
    %v66 = vpack.c.b16 %v60, %v59
    %v67 = vpack.c.b16 %v62, %v61
    %v68 = vpack.c.b16 %v64, %v63
    %vm73 = vcmask 523264
    %v75 = vsel %vm73, %v47, 0
    %v78 = vsel %vm73, %v48, 0
    %80 = vmatprep.subr.bf16.mxu0 0
    %81 = vmatpush1.bf16.msra.mxu0 0
    %82 = vmatprep.subr.bf16.mxu0 0
    %83 = vmatpush1.bf16.msra.mxu0 0
    %84 = vmatprep.subr.bf16.mxu0 0
    %85 = vmatpush1.bf16.msra.mxu0 0
    %86 = vmatprep.subr.bf16.mxu0 0
    %87 = vmatpush1.bf16.msra.mxu0 0
    %88 = vmatprep.subr.bf16.mxu0 0
    %89 = vmatpush1.bf16.msra.mxu0 %v68
    %90 = vmatprep.subr.bf16.mxu0 0
    %91 = vmatpush1.bf16.msra.mxu0 %v67
    %92 = vmatprep.subr.bf16.mxu0 0
    %93 = vmatpush1.bf16.msra.mxu0 %v66
    %94 = vmatprep.subr.bf16.mxu0 0
    %95 = vmatpush1.bf16.msra.mxu0 %v65
    %96 = vmatprep.subr.bf16.mxu0 0
    %97 = vmatpush2.bf16.msra.mxu0 0
    %98 = vmatprep.subr.bf16.mxu0 0
    %99 = vmatpush2.bf16.msra.mxu0 0
    %100 = vmatprep.subr.bf16.mxu0 0
    %101 = vmatpush2.bf16.msra.mxu0 0
    %102 = vmatprep.subr.bf16.mxu0 0
    %103 = vmatpush2.bf16.msra.mxu0 0
    %104 = vmatprep.subr.bf16.mxu0 0
    %105 = vmatpush2.bf16.msra.mxu0 0
    %106 = vmatprep.subr.bf16.mxu0 0
    %107 = vmatpush2.bf16.msra.mxu0 0
    %108 = vmatprep.subr.bf16.mxu0 0
    %109 = vmatpush2.bf16.msra.mxu0 0
    %110 = vmatprep.subr.bf16.mxu0 0
    %111 = vmatpush2.bf16.msra.mxu0 0
    %112 = vmatprep.mubr.bf16.mxu0 0
    %113 = vmatmul.mubr.bf16.gmra.mxu0 %v75
    %v114 = vpop.f32.mrf.mxu0
    %v115 = vadd.f32 %v37, %v114
    %v116 = vpop.f32.mrf.mxu0
    %v117 = vpop.f32.mrf.mxu0
    %v118 = vadd.f32 %v37, %v117
    %v119 = vpop.f32.mrf.mxu0
    %120 = vmatprep.mubr.bf16.mxu0 0
    %121 = vmatmul.mubr.bf16.gmra.mxu0 %v78
    %v122 = vpop.f32.mrf.mxu0
    %v123 = vadd.f32 %v37, %v122
    %v124 = vpop.f32.mrf.mxu0
    %v125 = vpop.f32.mrf.mxu0
    %v126 = vadd.f32 %v37, %v125
    %v127 = vpop.f32.mrf.mxu0
    %128 = vdwg.mxu0
    %vm129 = vcmask 261120
    %130 = vst.msk [vmem:[#allocation2] sm:$0xff] %vm129, %v115
    %131 = vst.msk [vmem:[#allocation2 + $0x8] sm:$0xff] %vm129, %v118
    %132 = vst.msk [vmem:[#allocation2 + $0x10] sm:$0xff] %vm129, %v123
    %133 = vst.msk [vmem:[#allocation2 + $0x18] sm:$0xff] %vm129, %v126
    // Predicated region
    $region14: #{token_learner_forward.2} parent=1 // pred_check
      _
    $region15: #{token_learner_forward.2} parent=1 // pred_check_branch
      %135 = sbr.rel (0) target = $region17
    $region16: #{token_learner_forward.2} parent=1 // pred_region
      %s137 = ssub.s32 512, 512
      %138 = vsyncadd [#allocation3], %s137
      %s139 = sshll.u32 [#allocation2], 4
      %s140 = int_to_ptr.vmem [resolvable:$true] %s139
      %145 = dma.vmem_to_hbm [thread:$0]  %s140, 512, %s3, [#allocation3], 128, 128, 8
    $region17: #{token_learner_forward.2} parent=1 // pred_fallthru
      _
    // Predicated region
    $region18: #{token_learner_forward.2} parent=1 // pred_check
      _
    $region19: #{token_learner_forward.2} parent=1 // pred_check_branch
      %147 = sbr.rel (0) target = $region21
    $region20: #{token_learner_forward.2} parent=1 // pred_region
      %148 = dma.done [#allocation3], 512
    $region21: #{token_learner_forward.2} parent=1 // pred_fallthru
      _
    %149 = vsyncpa [#allocation3], 1

</llo_original>
